<compile_context>
chip_gen: v7x
topology: tpu7x:2x2x1
jax: 0.10.0
libtpu: 0.0.40
codegen_flags: <defaults>
</compile_context>

<pallas_src>
import functools

import jax
import jax.numpy as jnp
from jax import lax
from jax.experimental import pallas as pl
from jax.experimental.pallas import tpu as pltpu

BN_EPS = 1e-5
LEAKY_SLOPE = 0.2      # GATConv default negative_slope
PADW = 128             # param slab lane width


def _round_up(a, b):
    return ((a + b - 1) // b) * b


def _vmem_limit_bytes():
    """Per-generation scoped-VMEM limit: 48 MiB on v5e/v6e (128 MiB physical),
    ~45% of physical on smaller-VMEM parts (v7x: ~28 MiB of 64 MiB)."""
    try:
        cap = int(pltpu.get_tpu_info().vmem_capacity_bytes)
    except Exception:
        cap = 128 * 1024 * 1024
    return int(min(48 * 1024 * 1024, cap * 0.45))


def _pack_params(named_params):
    """Pack many small parameter arrays into one [R, 128] f32 slab.

    Each entry is padded up to an 8-row boundary so the static slices inside the
    kernels start on sublane-tile boundaries.  Returns (slab, offsets, shapes)."""
    blocks, offsets, shapes = [], {}, {}
    cur = 0
    for name, arr in named_params:
        a2 = arr if arr.ndim == 2 else arr.reshape(1, -1)
        r, c = a2.shape
        assert c <= PADW, f"{name}: width {c} > {PADW}"
        r_pad = ((r + 7) // 8) * 8
        blk = jnp.zeros((r_pad, PADW), jnp.float32).at[:r, :c].set(a2.astype(jnp.float32))
        blocks.append(blk)
        offsets[name] = cur
        shapes[name] = (r, c)
        cur += r_pad
    return jnp.concatenate(blocks, axis=0), offsets, shapes


# ---------------------------------------------------------------------------
# Kernel A: GATConv(in_dim, h1), 1 head, add_self_loops=False.
# Gridded over dst-row tiles; only [TILE, N] attention temporaries are live.
# ---------------------------------------------------------------------------
def _gat_kernel(x_full_ref, x_tile_ref, adj_ref, slab_ref, gat_ref, *, offs, shapes):
    def P(name):
        off = offs[name]
        r, c = shapes[name]
        return slab_ref[off:off + r, :c]          # static slice of the param slab

    x_all = x_full_ref[...]                        # [Np, F]   all source nodes
    x_dst = x_tile_ref[...]                        # [TILE, F] this tile's dst nodes
    adjf = adj_ref[...].astype(jnp.float32)        # [TILE, Np]; bf16 in HBM, one upcast

    wg = P("wg")
    # x@Wg is tiny relative to the N^2 attention work; keep it f32 for exact logits.
    xw_all = jnp.dot(x_all, wg, preferred_element_type=jnp.float32)    # [Np, h1]
    xw_dst = jnp.dot(x_dst, wg, preferred_element_type=jnp.float32)    # [TILE, h1]

    # attention logits  e_ij = leaky_relu(a_dst.xw_i + a_src.xw_j)
    # s_dst: VPU multiply + lane reduce (no 1-lane-wide MXU output).
    s_dst = jnp.sum(xw_dst * P("adst"), axis=1, keepdims=True)          # [TILE, 1]
    # s_src: lane-dense [1, Np] MXU row (avoids an XLU transpose of a column reduce).
    s_src = lax.dot_general(P("asrc"), xw_all, (((1,), (1,)), ((), ())),
                            preferred_element_type=jnp.float32)         # [1, Np]
    score = s_dst + s_src                                               # [TILE, Np]
    score = jnp.maximum(score, LEAKY_SLOPE * score)                     # leaky_relu
    score = score + (adjf - 1.0) * 1e9                                  # additive mask bias
    row_max = jnp.max(score, axis=1, keepdims=True)
    e = adjf * jnp.exp(score - row_max)                                 # exact zeros off-edge
    denom = jnp.sum(e, axis=1, keepdims=True)
    attn = e * pl.reciprocal(jnp.maximum(denom, 1e-16), approx=True)
    gat = jnp.dot(attn.astype(jnp.bfloat16), xw_all.astype(jnp.bfloat16),
                  preferred_element_type=jnp.float32) + P("bg")         # [TILE, h1]
    gat_ref[...] = gat.astype(gat_ref.dtype)


# ---------------------------------------------------------------------------
# Kernel B: BN+ReLU, 2x GINConv, global_add_pool (before concat), MLP head.
# Small ungridded tail; keeps the bf16 adjacency resident in VMEM.
# ---------------------------------------------------------------------------
def _tail_kernel(gat_ref, adj_ref, pool_ref, slab_ref, out_ref, *, offs, shapes, n_valid):
    def P(name):
        off = offs[name]
        r, c = shapes[name]
        return slab_ref[off:off + r, :c]

    def Pb(name):
        return P(name).astype(jnp.bfloat16)

    n_pad = gat_ref.shape[0]
    inv_n = 1.0 / float(n_valid)
    # valid-node mask so zero-padded rows never pollute the BatchNorm batch stats
    mask = (lax.broadcasted_iota(jnp.int32, (n_pad, 1), 0) < n_valid).astype(jnp.float32)

    adj_bf = adj_ref[...]      # [Np, Np] bf16 (0/1, lossless)
    pool_bf = pool_ref[...]    # [G, Np]  bf16 (0/1, lossless)

    def bn_relu(h, g, b):
        # torch.nn.BatchNorm1d training mode: per-feature batch stats, biased var.
        hm = h * mask
        mean = jnp.sum(hm, axis=0, keepdims=True) * inv_n
        d = (h - mean) * mask
        var = jnp.sum(d * d, axis=0, keepdims=True) * inv_n
        return jnp.maximum((h - mean) * lax.rsqrt(var + BN_EPS) * g + b, 0.0)

    gcn1 = bn_relu(gat_ref[...], P("bn1g"), P("bn1b"))                  # relu(BN(gat))

    # GINConv (eps=0): nn(x_i + sum_{j in N(i)} x_j); nn = Sequential(MLP, BN, ReLU)
    # TODO(synk): repo's MLP([...]) definition is not in the snippet; assumed Linear->ReLU->Linear.
    def gin(h_in, w1, b1, w2, b2, g, b):
        agg = jnp.dot(adj_bf, h_in.astype(jnp.bfloat16),
                      preferred_element_type=jnp.float32)
        h = h_in + agg
        h = jnp.maximum(jnp.dot(h.astype(jnp.bfloat16), w1,
                                preferred_element_type=jnp.float32) + b1, 0.0)
        h = jnp.dot(h.astype(jnp.bfloat16), w2, preferred_element_type=jnp.float32) + b2
        return bn_relu(h, g, b)

    gcn2 = gin(gcn1, Pb("g2w1"), P("g2b1"), Pb("g2w2"), P("g2b2"), P("g2g"), P("g2b"))
    gcn3 = gin(gcn2, Pb("g3w1"), P("g3b1"), Pb("g3w2"), P("g3b2"), P("g3g"), P("g3b"))

    # global_add_pool BEFORE the concat: three [G, h] matmuls, then a tiny concat at G rows
    p1 = jnp.dot(pool_bf, gcn1.astype(jnp.bfloat16), preferred_element_type=jnp.float32)
    p2 = jnp.dot(pool_bf, gcn2.astype(jnp.bfloat16), preferred_element_type=jnp.float32)
    p3 = jnp.dot(pool_bf, gcn3.astype(jnp.bfloat16), preferred_element_type=jnp.float32)
    pooled = jnp.concatenate([p1, p2, p3], axis=1)                      # [G, h1+2h2]

    fc1 = jnp.dot(pooled.astype(jnp.bfloat16), Pb("wfc1"),
                  preferred_element_type=jnp.float32) + P("bfc1")
    fc2 = jnp.dot(fc1.astype(jnp.bfloat16), Pb("wfc2"),
                  preferred_element_type=jnp.float32) + P("bfc2")
    hid = jnp.maximum(fc2, 0.0)                                         # relu(fc(conv))
    out = jnp.dot(hid.astype(jnp.bfloat16), Pb("wcls"),
                  preferred_element_type=jnp.float32) + P("bcls")
    out_ref[...] = out.astype(out_ref.dtype)


def gnn_forward(x, adj, pool, slab, offs, shapes, n_classes, *, tile_m=512):
    n, f = x.shape
    g = pool.shape[0]
    h1 = shapes["wg"][1]

    tile = min(tile_m, _round_up(n, 8))
    n_pad = _round_up(n, tile)
    if n_pad != n:
        x = jnp.pad(x, ((0, n_pad - n), (0, 0)))
        adj = jnp.pad(adj, ((0, n_pad - n), (0, n_pad - n)))
        pool = jnp.pad(pool, ((0, 0), (0, n_pad - n)))

    # host-side bf16 for the 0/1 matrices: halves the dominant HBM->VMEM DMA bytes
    adj_bf = adj.astype(jnp.bfloat16)
    pool_bf = pool.astype(jnp.bfloat16)
    vmem = _vmem_limit_bytes()

    # ---- GAT layer: row-tiled, megacore-parallel grid ----
    gat = pl.pallas_call(
        functools.partial(_gat_kernel, offs=offs, shapes=shapes),
        out_shape=jax.ShapeDtypeStruct((n_pad, h1), jnp.float32),
        grid=(n_pad // tile,),
        in_specs=[
            pl.BlockSpec((n_pad, f), lambda i: (0, 0)),      # all source nodes
            pl.BlockSpec((tile, f), lambda i: (i, 0)),       # this tile's dst nodes
            pl.BlockSpec((tile, n_pad), lambda i: (i, 0)),   # adjacency row tile (bf16)
            pl.BlockSpec(slab.shape, lambda i: (0, 0)),      # packed params
        ],
        out_specs=pl.BlockSpec((tile, h1), lambda i: (i, 0)),
        compiler_params=pltpu.CompilerParams(
            dimension_semantics=("parallel",), vmem_limit_bytes=vmem),
    )(x, x, adj_bf, slab)

    # ---- tail: BN + GIN x2 + pool + head ----
    # TODO(synk): for N large enough that bf16 adj no longer fits resident, stream adj
    # row-tiles per GIN layer (re-reading adj 3x) instead of keeping it in VMEM.
    out = pl.pallas_call(
        functools.partial(_tail_kernel, offs=offs, shapes=shapes, n_valid=n),
        out_shape=jax.ShapeDtypeStruct((g, n_classes), jnp.float32),
        in_specs=[pl.BlockSpec(memory_space=pltpu.MemorySpace.VMEM)] * 4,
        out_specs=pl.BlockSpec(memory_space=pltpu.MemorySpace.VMEM),
        compiler_params=pltpu.CompilerParams(vmem_limit_bytes=vmem),
    )(gat, adj_bf, pool_bf, slab)
    return out


def init_params(key, in_dim, h1, h2, n_classes):
    ks = jax.random.split(key, 10)

    def lin(k, fan_in, fan_out):
        return jax.random.normal(k, (fan_in, fan_out), jnp.float32) / jnp.sqrt(
            jnp.float32(fan_in))

    return [
        # GATConv: W [in_dim, h1], att_src/att_dst [1, h1], bias [1, h1]; BN1
        ("wg",   lin(ks[0], in_dim, h1)),
        ("asrc", jax.random.normal(ks[1], (1, h1), jnp.float32) * 0.1),
        ("adst", jax.random.normal(ks[2], (1, h1), jnp.float32) * 0.1),
        ("bg",   jnp.zeros((1, h1), jnp.float32)),
        ("bn1g", jnp.ones((1, h1), jnp.float32)),
        ("bn1b", jnp.zeros((1, h1), jnp.float32)),
        # GIN block 2
        ("g2w1", lin(ks[3], h1, h2)), ("g2b1", jnp.zeros((1, h2), jnp.float32)),
        ("g2w2", lin(ks[4], h2, h2)), ("g2b2", jnp.zeros((1, h2), jnp.float32)),
        ("g2g",  jnp.ones((1, h2), jnp.float32)), ("g2b", jnp.zeros((1, h2), jnp.float32)),
        # GIN block 3
        ("g3w1", lin(ks[5], h2, h2)), ("g3b1", jnp.zeros((1, h2), jnp.float32)),
        ("g3w2", lin(ks[6], h2, h2)), ("g3b2", jnp.zeros((1, h2), jnp.float32)),
        ("g3g",  jnp.ones((1, h2), jnp.float32)), ("g3b", jnp.zeros((1, h2), jnp.float32)),
        # head: fc = Linear(h1+2h2, 32) -> Linear(32, 24); classify = Linear(24, C)
        ("wfc1", lin(ks[7], h1 + 2 * h2, 32)), ("bfc1", jnp.zeros((1, 32), jnp.float32)),
        ("wfc2", lin(ks[8], 32, 24)),          ("bfc2", jnp.zeros((1, 24), jnp.float32)),
        ("wcls", lin(ks[9], 24, n_classes)),   ("bcls", jnp.zeros((1, n_classes), jnp.float32)),
    ]


if __name__ == "__main__":
    key = jax.random.PRNGKey(0)
    N, in_dim, h1, h2, n_classes, G = 32, 16, 32, 32, 4, 2

    kx, kp = jax.random.split(key, 2)
    x = jax.random.normal(kx, (N, in_dim), jnp.float32)

    # graph assignment: first 16 nodes -> graph 0, last 16 -> graph 1
    batch = jnp.concatenate(
        [jnp.zeros(N // 2, jnp.int32), jnp.ones(N // 2, jnp.int32)])

    # deterministic edge_index: bidirectional ring within each graph + one chord per graph
    src_list, dst_list = [], []
    half = N // 2
    for gidx in range(G):
        base = gidx * half
        for i in range(half):
            s, d = base + i, base + (i + 1) % half
            src_list += [s, d]
            dst_list += [d, s]
        src_list += [base, base + half // 2]
        dst_list += [base + half // 2, base]
    src = jnp.array(src_list, jnp.int32)
    dst = jnp.array(dst_list, jnp.int32)

    # dense adjacency mask adj[target, source] and one-hot pooling matrix (plain-JAX glue)
    adj = jnp.zeros((N, N), jnp.float32).at[dst, src].set(1.0)
    pool = jax.nn.one_hot(batch, G, dtype=jnp.float32).T   # [G, N]

    named_params = init_params(kp, in_dim, h1, h2, n_classes)
    slab, offs, shapes = _pack_params(named_params)

    out = gnn_forward(x, adj, pool, slab, offs, shapes, n_classes)
    jax.block_until_ready(out)
    assert out.shape == (G, n_classes)
    assert bool(jnp.all(jnp.isfinite(out)))
    print("KERNEL_OK")
</pallas_src>

<mosaic_0001>
module attributes {stable_mosaic.version = 11 : i64} {
  func.func @_gat_kernel(%arg0: i32, %arg1: memref<32x16xf32, #tpu.memory_space<vmem>>, %arg2: memref<32x16xf32, #tpu.memory_space<vmem>>, %arg3: memref<32x32xbf16, #tpu.memory_space<vmem>>, %arg4: memref<424x128xf32, #tpu.memory_space<vmem>>, %arg5: memref<32x32xf32, #tpu.memory_space<vmem>>) attributes {dimension_semantics = [#tpu.dimension_semantics<parallel>], iteration_bounds = array<i64: 1>, scalar_prefetch = 0 : i64, scratch_operands = 0 : i64, tpu.core_type = #tpu.core_type<tc>, window_params = [{pipeline_mode = #tpu.pipeline_mode<synchronous>, transform_indices = @transform_0, window_bounds = array<i64: 32, 16>}, {transform_indices = @transform_1, window_bounds = array<i64: 32, 16>}, {transform_indices = @transform_2, window_bounds = array<i64: 32, 32>}, {pipeline_mode = #tpu.pipeline_mode<synchronous>, transform_indices = @transform_3, window_bounds = array<i64: 424, 128>}, {transform_indices = @transform_4, window_bounds = array<i64: 32, 32>}]} {
    %c0 = arith.constant 0 : index
    %c0_0 = arith.constant 0 : index
    %0 = vector.load %arg1[%c0, %c0_0] : memref<32x16xf32, #tpu.memory_space<vmem>>, vector<32x16xf32>
    %c0_1 = arith.constant 0 : index
    %c0_2 = arith.constant 0 : index
    %1 = vector.load %arg2[%c0_1, %c0_2] : memref<32x16xf32, #tpu.memory_space<vmem>>, vector<32x16xf32>
    %c0_3 = arith.constant 0 : index
    %c0_4 = arith.constant 0 : index
    %2 = vector.load %arg3[%c0_3, %c0_4] : memref<32x32xbf16, #tpu.memory_space<vmem>>, vector<32x32xbf16>
    %3 = arith.extf %2 : vector<32x32xbf16> to vector<32x32xf32>
    %c0_5 = arith.constant 0 : index
    %c0_6 = arith.constant 0 : index
    %4 = vector.load %arg4[%c0_5, %c0_6] : memref<424x128xf32, #tpu.memory_space<vmem>>, vector<16x32xf32>
    %cst = arith.constant dense<0.000000e+00> : vector<32x32xf32>
    %5 = tpu.matmul %0, %4, %cst {dimension_numbers = #tpu.dot_dimension_numbers<[1], [0], [0], [1], [0, 0, 1, 1], [], []>} : vector<32x16xf32>, vector<16x32xf32>, vector<32x32xf32> -> vector<32x32xf32>
    %cst_7 = arith.constant dense<0.000000e+00> : vector<32x32xf32>
    %6 = tpu.matmul %1, %4, %cst_7 {dimension_numbers = #tpu.dot_dimension_numbers<[1], [0], [0], [1], [0, 0, 1, 1], [], []>} : vector<32x16xf32>, vector<16x32xf32>, vector<32x32xf32> -> vector<32x32xf32>
    %c24 = arith.constant 24 : index
    %c0_8 = arith.constant 0 : index
    %7 = vector.load %arg4[%c24, %c0_8] : memref<424x128xf32, #tpu.memory_space<vmem>>, vector<1x32xf32>
    %8 = vector.broadcast %7 : vector<1x32xf32> to vector<32x32xf32>
    %9 = arith.mulf %6, %8 : vector<32x32xf32>
    %cst_9 = arith.constant dense<0.000000e+00> : vector<32xf32>
    %10 = vector.multi_reduction <add>, %9, %cst_9 [1] : vector<32x32xf32> to vector<32xf32>
    %11 = vector.shape_cast %10 : vector<32xf32> to vector<32x1xf32>
    %c16 = arith.constant 16 : index
    %c0_10 = arith.constant 0 : index
    %12 = vector.load %arg4[%c16, %c0_10] : memref<424x128xf32, #tpu.memory_space<vmem>>, vector<1x32xf32>
    %cst_11 = arith.constant dense<0.000000e+00> : vector<1x32xf32>
    %13 = tpu.matmul %12, %5, %cst_11 {dimension_numbers = #tpu.dot_dimension_numbers<[1], [1], [0], [0], [0, 0, 1, 0], [], []>} : vector<1x32xf32>, vector<32x32xf32>, vector<1x32xf32> -> vector<1x32xf32>
    %14 = vector.broadcast %11 : vector<32x1xf32> to vector<32x32xf32>
    %15 = vector.broadcast %13 : vector<1x32xf32> to vector<32x32xf32>
    %16 = arith.addf %14, %15 : vector<32x32xf32>
    %cst_12 = arith.constant 2.000000e-01 : f32
    %17 = vector.broadcast %cst_12 : f32 to vector<32x32xf32>
    %18 = arith.mulf %17, %16 : vector<32x32xf32>
    %19 = arith.maximumf %16, %18 : vector<32x32xf32>
    %cst_13 = arith.constant 1.000000e+00 : f32
    %20 = vector.broadcast %cst_13 : f32 to vector<32x32xf32>
    %21 = arith.subf %3, %20 : vector<32x32xf32>
    %cst_14 = arith.constant 1.000000e+09 : f32
    %22 = vector.broadcast %cst_14 : f32 to vector<32x32xf32>
    %23 = arith.mulf %21, %22 : vector<32x32xf32>
    %24 = arith.addf %19, %23 : vector<32x32xf32>
    %cst_15 = arith.constant dense<0xFF800000> : vector<32xf32>
    %25 = vector.multi_reduction <maximumf>, %24, %cst_15 [1] : vector<32x32xf32> to vector<32xf32>
    %26 = vector.shape_cast %25 : vector<32xf32> to vector<32x1xf32>
    %27 = vector.broadcast %26 : vector<32x1xf32> to vector<32x32xf32>
    %28 = arith.subf %24, %27 : vector<32x32xf32>
    %29 = math.exp %28 : vector<32x32xf32>
    %30 = arith.mulf %3, %29 : vector<32x32xf32>
    %cst_16 = arith.constant dense<0.000000e+00> : vector<32xf32>
    %31 = vector.multi_reduction <add>, %30, %cst_16 [1] : vector<32x32xf32> to vector<32xf32>
    %32 = vector.shape_cast %31 : vector<32xf32> to vector<32x1xf32>
    %cst_17 = arith.constant 1.000000e-16 : f32
    %33 = vector.broadcast %cst_17 : f32 to vector<32x1xf32>
    %34 = arith.maximumf %32, %33 : vector<32x1xf32>
    %35 = tpu.reciprocal %34 {approx = true} : vector<32x1xf32> -> vector<32x1xf32>
    %36 = vector.broadcast %35 : vector<32x1xf32> to vector<32x32xf32>
    %37 = arith.mulf %30, %36 : vector<32x32xf32>
    %38 = arith.truncf %37 : vector<32x32xf32> to vector<32x32xbf16>
    %39 = arith.truncf %5 : vector<32x32xf32> to vector<32x32xbf16>
    %cst_18 = arith.constant dense<0.000000e+00> : vector<32x32xf32>
    %40 = tpu.matmul %38, %39, %cst_18 {dimension_numbers = #tpu.dot_dimension_numbers<[1], [0], [0], [1], [0, 0, 1, 1], [], []>} : vector<32x32xbf16>, vector<32x32xbf16>, vector<32x32xf32> -> vector<32x32xf32>
    %c32 = arith.constant 32 : index
    %c0_19 = arith.constant 0 : index
    %41 = vector.load %arg4[%c32, %c0_19] : memref<424x128xf32, #tpu.memory_space<vmem>>, vector<1x32xf32>
    %42 = vector.broadcast %41 : vector<1x32xf32> to vector<32x32xf32>
    %43 = arith.addf %40, %42 : vector<32x32xf32>
    %c0_20 = arith.constant 0 : index
    %c0_21 = arith.constant 0 : index
    %44 = vector.load %arg5[%c0_20, %c0_21] : memref<32x32xf32, #tpu.memory_space<vmem>>, vector<32x32xf32>
    tpu.vector_store %arg5[%c0_20, %c0_21], %43 {strides = array<i32>} : memref<32x32xf32, #tpu.memory_space<vmem>>, vector<32x32xf32>,
    return
  }
  func.func @transform_0(%arg0: i32) -> (i32, i32) {
    %c0_i32 = arith.constant 0 : i32
    %c0_i32_0 = arith.constant 0 : i32
    %c0_i32_1 = arith.constant 0 : i32
    return %c0_i32, %c0_i32_0 : i32, i32
  }
  func.func @transform_1(%arg0: i32) -> (i32, i32) {
    %c0_i32 = arith.constant 0 : i32
    %c0_i32_0 = arith.constant 0 : i32
    return %arg0, %c0_i32 : i32, i32
  }
  func.func @transform_2(%arg0: i32) -> (i32, i32) {
    %c0_i32 = arith.constant 0 : i32
    %c0_i32_0 = arith.constant 0 : i32
    return %arg0, %c0_i32 : i32, i32
  }
  func.func @transform_3(%arg0: i32) -> (i32, i32) {
    %c0_i32 = arith.constant 0 : i32
    %c0_i32_0 = arith.constant 0 : i32
    %c0_i32_1 = arith.constant 0 : i32
    return %c0_i32, %c0_i32_0 : i32, i32
  }
  func.func @transform_4(%arg0: i32) -> (i32, i32) {
    %c0_i32 = arith.constant 0 : i32
    %c0_i32_0 = arith.constant 0 : i32
    return %arg0, %c0_i32 : i32, i32
  }
}

</mosaic_0001>

<llo_original>
// kernel: tpu_custom_call.1
$region0: #{tpu_custom_call.1}
  #allocation0 [shape = 'u32[]', space=smem, size = 0x4, offset = 0x4, fixed_abs, tag = 'smem constant byte address 0x4 - core index']
  #allocation1 [shape = 'u32[144,128]{1,0:T(1,128)}', space=vmem, size = 0x12000, scoped, tag = 'internal scratch']
  %s0 = inlined_call_operand.vmem [shape: f32[32,16], index: 0, kind: input, shape index: {}]
  %s1 = inlined_call_operand.vmem [shape: f32[32,16], index: 1, kind: input, shape index: {}]
  %s2 = inlined_call_operand.vmem [shape: bf16[32,32], index: 2, kind: input, shape index: {}]
  %s3 = inlined_call_operand.hbm [shape: f32[424,128], index: 3, kind: input, shape index: {}]
  %s4 = inlined_call_operand.hbm [shape: f32[32,32], index: 4, kind: output, shape index: {}]
  %s5 = sld [smem:[#allocation0]]
  $region30: #{tpu_custom_call.1} parent=0
    _
  %s7 = ssub.s32 1, %s5
  %s8 = scalar_select 0, %s7, %s5
  $region1: #{tpu_custom_call.1} parent=0
    #allocation2 [shape = 'u8[217088]{0}', space=vmem, size = 0x35000, scoped, tag = 'input window, operand 3, single buffered']
    #allocation3 [shape = 's32[1]{0}', space=sflag, size = 0x4, scoped, tag = 'scoped memory for tpu_custom_call.1']
    #allocation4 [shape = 's32[1]{0}', space=sflag, size = 0x4, scoped, tag = 'scoped memory for tpu_custom_call.1']
    #allocation5 [shape = 'u8[16384]{0}', space=vmem, size = 0x4000, scoped, tag = 'output window, operand 0, single buffered']
    %9 = vsyncpa [#allocation3], 0
    %10 = vsyncpa [#allocation4], 0
    // Predicated region
    $region2: #{tpu_custom_call.1} parent=1 // pred_check
      _
    $region3: #{tpu_custom_call.1} parent=1 // pred_check_branch
      %12 = sbr.rel (0) target = $region5
    $region4: #{tpu_custom_call.1} parent=1 // pred_region
      _
    $region5: #{tpu_custom_call.1} parent=1 // pred_fallthru
      _
    // Predicated region
    $region6: #{tpu_custom_call.1} parent=1 // pred_check
      _
    $region7: #{tpu_custom_call.1} parent=1 // pred_check_branch
      %14 = sbr.rel (0) target = $region9
    $region8: #{tpu_custom_call.1} parent=1 // pred_region
      _
    $region9: #{tpu_custom_call.1} parent=1 // pred_fallthru
      _
    // Predicated region
    $region10: #{tpu_custom_call.1} parent=1 // pred_check
      _
    $region11: #{tpu_custom_call.1} parent=1 // pred_check_branch
      %16 = sbr.rel (0) target = $region13
    $region12: #{tpu_custom_call.1} parent=1 // pred_region
      _
    $region13: #{tpu_custom_call.1} parent=1 // pred_fallthru
      _
    // Predicated region
    $region14: #{tpu_custom_call.1} parent=1 // pred_check
      _
    $region15: #{tpu_custom_call.1} parent=1 // pred_check_branch
      %18 = sbr.rel (0) target = $region17
    $region16: #{tpu_custom_call.1} parent=1 // pred_region
      %s20 = ssub.s32 6784, 6784
      %21 = vsyncadd [#allocation3], %s20
      %s22 = sshll.u32 [#allocation2], 4
      %s23 = int_to_ptr.vmem [resolvable:$true] %s22
      %28 = dma.hbm_to_vmem [thread:$0]  %s3, 6784, %s23, [#allocation3], 128, 128, 8
    $region17: #{tpu_custom_call.1} parent=1 // pred_fallthru
      _
    // Predicated region
    $region18: #{tpu_custom_call.1} parent=1 // pred_check
      _
    $region19: #{tpu_custom_call.1} parent=1 // pred_check_branch
      %30 = sbr.rel (0) target = $region21
    $region20: #{tpu_custom_call.1} parent=1 // pred_region
      %31 = dma.done [#allocation3], 6784
    $region21: #{tpu_custom_call.1} parent=1 // pred_fallthru
      _
    %v33 = vld [vmem:[%s0] sm:$0xff]
    %v34 = vld [vmem:[%s0 + $0x8] sm:$0xff]
    %v35 = vld [vmem:[%s0 + $0x10] sm:$0xff]
    %v36 = vld [vmem:[%s0 + $0x18] sm:$0xff]
    %v37 = vld [vmem:[%s1] sm:$0xff]
    %v38 = vld [vmem:[%s1 + $0x8] sm:$0xff]
    %v39 = vld [vmem:[%s1 + $0x10] sm:$0xff]
    %v40 = vld [vmem:[%s1 + $0x18] sm:$0xff]
    %v41 = vld [vmem:[%s2] sm:$0xf]
    %v42 = vld [vmem:[%s2 + $0x4] sm:$0xf]
    %v43 = vld [vmem:[%s2 + $0x8] sm:$0xf]
    %v44 = vld [vmem:[%s2 + $0xc] sm:$0xf]
    %v45 = vunpack.c.l.bf16 %v41
    %v46 = vunpack.c.l.bf16 %v42
    %v47 = vunpack.c.l.bf16 %v43
    %v48 = vunpack.c.l.bf16 %v44
    %v49 = vld [vmem:[#allocation2] sm:$0xff]
    %v50 = vld [vmem:[#allocation2 + $0x8] sm:$0xff]
    %vm51 = vcmask 130048
    %v53 = vsel %vm51, %v33, 0
    %v56 = vsel %vm51, %v34, 0
    %v59 = vsel %vm51, %v35, 0
    %v62 = vsel %vm51, %v36, 0
    %64 = vmatprep.subr.mxu0 0.0
    %65 = vmatpush1.msra.mxu0 %v49
    %66 = vmatprep.subr.mxu0 0.0
    %67 = vmatpush1.msra.mxu0 %v50
    %68 = vmatprep.subr.mxu0 0.0
    %69 = vmatpush1.msra.mxu0 0.0
    %70 = vmatprep.subr.mxu0 0.0
    %71 = vmatpush1.msra.mxu0 0.0
    %72 = vmatprep.subr.mxu0 0.0
    %73 = vmatpush1.msra.mxu0 0.0
    %74 = vmatprep.subr.mxu0 0.0
    %75 = vmatpush1.msra.mxu0 0.0
    %76 = vmatprep.subr.mxu0 0.0
    %77 = vmatpush1.msra.mxu0 0.0
    %78 = vmatprep.subr.mxu0 0.0
    %79 = vmatpush1.msra.mxu0 0.0
    %80 = vmatprep.subr.mxu0 0.0
    %81 = vmatpush1.msra.mxu0 0.0
    %82 = vmatprep.subr.mxu0 0.0
    %83 = vmatpush1.msra.mxu0 0.0
    %84 = vmatprep.subr.mxu0 0.0
    %85 = vmatpush1.msra.mxu0 0.0
    %86 = vmatprep.subr.mxu0 0.0
    %87 = vmatpush1.msra.mxu0 0.0
    %88 = vmatprep.subr.mxu0 0.0
    %89 = vmatpush1.msra.mxu0 0.0
    %90 = vmatprep.subr.mxu0 0.0
    %91 = vmatpush1.msra.mxu0 0.0
    %92 = vmatprep.subr.mxu0 0.0
    %93 = vmatpush1.msra.mxu0 0.0
    %94 = vmatprep.subr.mxu0 0.0
    %95 = vmatpush1.msra.mxu0 0.0
    %96 = vmatprep.subr.mxu0 0.0
    %97 = vmatpush1.msra.mxu0 0.0
    %98 = vmatprep.subr.mxu0 0.0
    %99 = vmatpush1.msra.mxu0 0.0
    %100 = vmatprep.subr.mxu0 0.0
    %101 = vmatpush1.msra.mxu0 0.0
    %102 = vmatprep.subr.mxu0 0.0
    %103 = vmatpush1.msra.mxu0 0.0
    %104 = vmatprep.subr.mxu0 0.0
    %105 = vmatpush1.msra.mxu0 0.0
    %106 = vmatprep.subr.mxu0 0.0
    %107 = vmatpush1.msra.mxu0 0.0
    %108 = vmatprep.subr.mxu0 0.0
    %109 = vmatpush1.msra.mxu0 0.0
    %110 = vmatprep.subr.mxu0 0.0
    %111 = vmatpush1.msra.mxu0 0.0
    %112 = vmatprep.subr.mxu0 0.0
    %113 = vmatpush1.msra.mxu0 0.0
    %114 = vmatprep.subr.mxu0 0.0
    %115 = vmatpush1.msra.mxu0 0.0
    %116 = vmatprep.subr.mxu0 0.0
    %117 = vmatpush1.msra.mxu0 0.0
    %118 = vmatprep.subr.mxu0 0.0
    %119 = vmatpush1.msra.mxu0 0.0
    %120 = vmatprep.subr.mxu0 0.0
    %121 = vmatpush1.msra.mxu0 0.0
    %122 = vmatprep.subr.mxu0 0.0
    %123 = vmatpush1.msra.mxu0 0.0
    %124 = vmatprep.subr.mxu0 0.0
    %125 = vmatpush1.msra.mxu0 0.0
    %126 = vmatprep.subr.mxu0 0.0
    %127 = vmatpush1.msra.mxu0 0.0
    %128 = vmatprep.mubr.f32.mxu0 0.0
    %129 = vmatmul.mubr.f32.gmra.mrb[0].mxu0 %v53
    %v130 = vpop.f32.mrb[0].mxu0
    %v131 = vadd.f32 0.0, %v130
    %v132 = vpop.f32.mrb[0].mxu0
    %133 = vmatprep.mubr.f32.mxu0 0.0
    %134 = vmatmul.mubr.f32.gmra.mrb[0].mxu0 %v56
    %v135 = vpop.f32.mrb[0].mxu0
    %v136 = vadd.f32 0.0, %v135
    %v137 = vpop.f32.mrb[0].mxu0
    %138 = vmatprep.mubr.f32.mxu0 0.0
    %139 = vmatmul.mubr.f32.gmra.mrb[0].mxu0 %v59
    %v140 = vpop.f32.mrb[0].mxu0
    %v141 = vadd.f32 0.0, %v140
    %v142 = vpop.f32.mrb[0].mxu0
    %143 = vmatprep.mubr.f32.mxu0 0.0
    %144 = vmatmul.mubr.f32.gmra.mrb[0].mxu0 %v62
    %v145 = vpop.f32.mrb[0].mxu0
    %v146 = vadd.f32 0.0, %v145
    %v147 = vpop.f32.mrb[0].mxu0
    %148 = vdwg.mxu0
    %v150 = vsel %vm51, %v37, 0
    %v153 = vsel %vm51, %v38, 0
    %v156 = vsel %vm51, %v39, 0
    %v159 = vsel %vm51, %v40, 0
    %161 = vmatprep.subr.mxu0 0.0
    %162 = vmatpush1.msra.mxu0 %v49
    %163 = vmatprep.subr.mxu0 0.0
    %164 = vmatpush1.msra.mxu0 %v50
    %165 = vmatprep.subr.mxu0 0.0
    %166 = vmatpush1.msra.mxu0 0.0
    %167 = vmatprep.subr.mxu0 0.0
    %168 = vmatpush1.msra.mxu0 0.0
    %169 = vmatprep.subr.mxu0 0.0
    %170 = vmatpush1.msra.mxu0 0.0
    %171 = vmatprep.subr.mxu0 0.0
    %172 = vmatpush1.msra.mxu0 0.0
    %173 = vmatprep.subr.mxu0 0.0
    %174 = vmatpush1.msra.mxu0 0.0
    %175 = vmatprep.subr.mxu0 0.0
    %176 = vmatpush1.msra.mxu0 0.0
    %177 = vmatprep.subr.mxu0 0.0
    %178 = vmatpush1.msra.mxu0 0.0
    %179 = vmatprep.subr.mxu0 0.0
    %180 = vmatpush1.msra.mxu0 0.0
    %181 = vmatprep.subr.mxu0 0.0
    %182 = vmatpush1.msra.mxu0 0.0
    %183 = vmatprep.subr.mxu0 0.0
    %184 = vmatpush1.msra.mxu0 0.0
    %185 = vmatprep.subr.mxu0 0.0
    %186 = vmatpush1.msra.mxu0 0.0
    %187 = vmatprep.subr.mxu0 0.0
    %188 = vmatpush1.msra.mxu0 0.0
    %189 = vmatprep.subr.mxu0 0.0
    %190 = vmatpush1.msra.mxu0 0.0
    %191 = vmatprep.subr.mxu0 0.0
    %192 = vmatpush1.msra.mxu0 0.0
    %193 = vmatprep.subr.mxu0 0.0
    %194 = vmatpush1.msra.mxu0 0.0
    %195 = vmatprep.subr.mxu0 0.0
    %196 = vmatpush1.msra.mxu0 0.0
    %197 = vmatprep.subr.mxu0 0.0
    %198 = vmatpush1.msra.mxu0 0.0
    %199 = vmatprep.subr.mxu0 0.0
    %200 = vmatpush1.msra.mxu0 0.0
    %201 = vmatprep.subr.mxu0 0.0
    %202 = vmatpush1.msra.mxu0 0.0
    %203 = vmatprep.subr.mxu0 0.0
    %204 = vmatpush1.msra.mxu0 0.0
    %205 = vmatprep.subr.mxu0 0.0
    %206 = vmatpush1.msra.mxu0 0.0
    %207 = vmatprep.subr.mxu0 0.0
    %208 = vmatpush1.msra.mxu0 0.0
    %209 = vmatprep.subr.mxu0 0.0
    %210 = vmatpush1.msra.mxu0 0.0
    %211 = vmatprep.subr.mxu0 0.0
    %212 = vmatpush1.msra.mxu0 0.0
    %213 = vmatprep.subr.mxu0 0.0
    %214 = vmatpush1.msra.mxu0 0.0
    %215 = vmatprep.subr.mxu0 0.0
    %216 = vmatpush1.msra.mxu0 0.0
    %217 = vmatprep.subr.mxu0 0.0
    %218 = vmatpush1.msra.mxu0 0.0
    %219 = vmatprep.subr.mxu0 0.0
    %220 = vmatpush1.msra.mxu0 0.0
    %221 = vmatprep.subr.mxu0 0.0
    %222 = vmatpush1.msra.mxu0 0.0
    %223 = vmatprep.subr.mxu0 0.0
    %224 = vmatpush1.msra.mxu0 0.0
    %225 = vmatprep.mubr.f32.mxu0 0.0
    %226 = vmatmul.mubr.f32.gmra.mrb[0].mxu0 %v150
    %v227 = vpop.f32.mrb[0].mxu0
    %v228 = vadd.f32 0.0, %v227
    %v229 = vpop.f32.mrb[0].mxu0
    %230 = vmatprep.mubr.f32.mxu0 0.0
    %231 = vmatmul.mubr.f32.gmra.mrb[0].mxu0 %v153
    %v232 = vpop.f32.mrb[0].mxu0
    %v233 = vadd.f32 0.0, %v232
    %v234 = vpop.f32.mrb[0].mxu0
    %235 = vmatprep.mubr.f32.mxu0 0.0
    %236 = vmatmul.mubr.f32.gmra.mrb[0].mxu0 %v156
    %v237 = vpop.f32.mrb[0].mxu0
    %v238 = vadd.f32 0.0, %v237
    %v239 = vpop.f32.mrb[0].mxu0
    %240 = vmatprep.mubr.f32.mxu0 0.0
    %241 = vmatmul.mubr.f32.gmra.mrb[0].mxu0 %v159
    %v242 = vpop.f32.mrb[0].mxu0
    %v243 = vadd.f32 0.0, %v242
    %v244 = vpop.f32.mrb[0].mxu0
    %245 = vdwg.mxu0
    %v246 = vld [vmem:[#allocation2 + $0x18] sm:$0x1]
    %v247 = vlaneseq
    %v248 = vshrl.u32 %v247, 7
    %v249 = vsub.s32 0, %v248
    %v250 = vrot.slane %v246, %v249
    %v251 = vmul.f32 %v228, %v250
    %v252 = vmul.f32 %v233, %v250
    %v253 = vmul.f32 %v238, %v250
    %v254 = vmul.f32 %v243, %v250
    %vm255 = vcmask 261120
    %v256 = vsel %vm255, %v251, 0.0
    %257 = vadd.xlane.f32.xlu0 %v256
    %v258 = vpop.xlane.xlu0 %257
    %v259 = vsel %vm255, %v252, 0.0
    %260 = vadd.xlane.f32.xlu0 %v259
    %v261 = vpop.xlane.xlu0 %260
    %v262 = vsel %vm255, %v253, 0.0
    %263 = vadd.xlane.f32.xlu0 %v262
    %v264 = vpop.xlane.xlu0 %263
    %v265 = vsel %vm255, %v254, 0.0
    %266 = vadd.xlane.f32.xlu0 %v265
    %v267 = vpop.xlane.xlu0 %266
    %v268 = vld [vmem:[#allocation2 + $0x10] sm:$0x1]
    %v270 = vsel %vm255, %v268, 0
    %v273 = vsel %vm255, %v131, 0
    %v276 = vsel %vm255, %v136, 0
    %v279 = vsel %vm255, %v141, 0
    %v282 = vsel %vm255, %v146, 0
    %284 = vmatprep.subr.mxu0 0.0
    %285 = vmatpush1.xpose.msra.mxu0 %v273
    %286 = vmatprep.subr.mxu0 0.0
    %287 = vmatpush1.xpose.msra.mxu0 %v276
    %288 = vmatprep.subr.mxu0 0.0
    %289 = vmatpush1.xpose.msra.mxu0 %v279
    %290 = vmatprep.subr.mxu0 0.0
    %291 = vmatpush1.xpose.msra.mxu0 %v282
    %292 = vmatprep.subr.mxu0 0.0
    %293 = vmatpush1.xpose.msra.mxu0 0.0
    %294 = vmatprep.subr.mxu0 0.0
    %295 = vmatpush1.xpose.msra.mxu0 0.0
    %296 = vmatprep.subr.mxu0 0.0
    %297 = vmatpush1.xpose.msra.mxu0 0.0
    %298 = vmatprep.subr.mxu0 0.0
    %299 = vmatpush1.xpose.msra.mxu0 0.0
    %300 = vmatprep.subr.mxu0 0.0
    %301 = vmatpush1.xpose.msra.mxu0 0.0
    %302 = vmatprep.subr.mxu0 0.0
    %303 = vmatpush1.xpose.msra.mxu0 0.0
    %304 = vmatprep.subr.mxu0 0.0
    %305 = vmatpush1.xpose.msra.mxu0 0.0
    %306 = vmatprep.subr.mxu0 0.0
    %307 = vmatpush1.xpose.msra.mxu0 0.0
    %308 = vmatprep.subr.mxu0 0.0
    %309 = vmatpush1.xpose.msra.mxu0 0.0
    %310 = vmatprep.subr.mxu0 0.0
    %311 = vmatpush1.xpose.msra.mxu0 0.0
    %312 = vmatprep.subr.mxu0 0.0
    %313 = vmatpush1.xpose.msra.mxu0 0.0
    %314 = vmatprep.subr.mxu0 0.0
    %315 = vmatpush1.xpose.msra.mxu0 0.0
    %316 = vmatprep.subr.mxu0 0.0
    %317 = vmatpush1.xpose.msra.mxu0 0.0
    %318 = vmatprep.subr.mxu0 0.0
    %319 = vmatpush1.xpose.msra.mxu0 0.0
    %320 = vmatprep.subr.mxu0 0.0
    %321 = vmatpush1.xpose.msra.mxu0 0.0
    %322 = vmatprep.subr.mxu0 0.0
    %323 = vmatpush1.xpose.msra.mxu0 0.0
    %324 = vmatprep.subr.mxu0 0.0
    %325 = vmatpush1.xpose.msra.mxu0 0.0
    %326 = vmatprep.subr.mxu0 0.0
    %327 = vmatpush1.xpose.msra.mxu0 0.0
    %328 = vmatprep.subr.mxu0 0.0
    %329 = vmatpush1.xpose.msra.mxu0 0.0
    %330 = vmatprep.subr.mxu0 0.0
    %331 = vmatpush1.xpose.msra.mxu0 0.0
    %332 = vmatprep.subr.mxu0 0.0
    %333 = vmatpush1.xpose.msra.mxu0 0.0
    %334 = vmatprep.subr.mxu0 0.0
    %335 = vmatpush1.xpose.msra.mxu0 0.0
    %336 = vmatprep.subr.mxu0 0.0
    %337 = vmatpush1.xpose.msra.mxu0 0.0
    %338 = vmatprep.subr.mxu0 0.0
    %339 = vmatpush1.xpose.msra.mxu0 0.0
    %340 = vmatprep.subr.mxu0 0.0
    %341 = vmatpush1.xpose.msra.mxu0 0.0
    %342 = vmatprep.subr.mxu0 0.0
    %343 = vmatpush1.xpose.msra.mxu0 0.0
    %344 = vmatprep.subr.mxu0 0.0
    %345 = vmatpush1.xpose.msra.mxu0 0.0
    %346 = vmatprep.subr.mxu0 0.0
    %347 = vmatpush1.xpose.msra.mxu0 0.0
    %348 = vmatprep.mubr.f32.mxu0 0.0
    %349 = vmatmul.mubr.f32.gmra.mrb[0].mxu0 %v270
    %v350 = vpop.f32.mrb[0].mxu0
    %v351 = vadd.f32 0.0, %v350
    %v352 = vpop.f32.mrb[0].mxu0
    %353 = vdwg.mxu0
    %v354 = vlaneseq
    %v355 = vshrl.u32 %v354, 7
    %v356 = vsub.s32 0, %v355
    %v357 = vrot.slane %v351, %v356
    %v358 = vadd.f32 %v258, %v357
    %v359 = vadd.f32 %v261, %v357
    %v360 = vadd.f32 %v264, %v357
    %v361 = vadd.f32 %v267, %v357
    %v362 = vmul.f32 %v358, 0.2
    %v363 = vmul.f32 %v359, 0.2
    %v364 = vmul.f32 %v360, 0.2
    %v365 = vmul.f32 %v361, 0.2
    %v366 = vmax.f32 %v358, %v362
    %v367 = vmax.f32 %v359, %v363
    %v368 = vmax.f32 %v360, %v364
    %v369 = vmax.f32 %v361, %v365
    %v370 = vsub.f32 %v45, 1.0
    %v371 = vsub.f32 %v46, 1.0
    %v372 = vsub.f32 %v47, 1.0
    %v373 = vsub.f32 %v48, 1.0
    %v374 = vmul.f32 %v370, 1e+09
    %v375 = vmul.f32 %v371, 1e+09
    %v376 = vmul.f32 %v372, 1e+09
    %v377 = vmul.f32 %v373, 1e+09
    %v378 = vadd.f32 %v366, %v374
    %v379 = vadd.f32 %v367, %v375
    %v380 = vadd.f32 %v368, %v376
    %v381 = vadd.f32 %v369, %v377
    %v382 = vsel %vm255, %v378, -inf
    %383 = vmax.xlane.f32.xlu0 %v382
    %v384 = vpop.xlane.xlu0 %383
    %v385 = vsel %vm255, %v379, -inf
    %386 = vmax.xlane.f32.xlu0 %v385
    %v387 = vpop.xlane.xlu0 %386
    %v388 = vsel %vm255, %v380, -inf
    %389 = vmax.xlane.f32.xlu0 %v388
    %v390 = vpop.xlane.xlu0 %389
    %v391 = vsel %vm255, %v381, -inf
    %392 = vmax.xlane.f32.xlu0 %v391
    %v393 = vpop.xlane.xlu0 %392
    %v394 = vsub.f32 %v378, %v384
    %v395 = vsub.f32 %v379, %v387
    %v396 = vsub.f32 %v380, %v390
    %v397 = vsub.f32 %v381, %v393
    %v398 = vmul.f32 %v394, 1.442695
    %v399 = vpow.pop %v398
    %v400 = vmul.f32 %v395, 1.442695
    %v401 = vpow.pop %v400
    %v402 = vmul.f32 %v396, 1.442695
    %v403 = vpow.pop %v402
    %v404 = vmul.f32 %v397, 1.442695
    %v405 = vpow.pop %v404
    %v406 = vmul.f32 %v45, %v399
    %v407 = vmul.f32 %v46, %v401
    %v408 = vmul.f32 %v47, %v403
    %v409 = vmul.f32 %v48, %v405
    %v410 = vsel %vm255, %v406, 0.0
    %411 = vadd.xlane.f32.xlu0 %v410
    %v412 = vpop.xlane.xlu0 %411
    %v413 = vsel %vm255, %v407, 0.0
    %414 = vadd.xlane.f32.xlu0 %v413
    %v415 = vpop.xlane.xlu0 %414
    %v416 = vsel %vm255, %v408, 0.0
    %417 = vadd.xlane.f32.xlu0 %v416
    %v418 = vpop.xlane.xlu0 %417
    %v419 = vsel %vm255, %v409, 0.0
    %420 = vadd.xlane.f32.xlu0 %v419
    %v421 = vpop.xlane.xlu0 %420
    %v422 = vmax.f32 %v412, 1e-16
    %v423 = vmax.f32 %v415, 1e-16
    %v424 = vmax.f32 %v418, 1e-16
    %v425 = vmax.f32 %v421, 1e-16
    %v426 = vrcp.pop %v422
    %v427 = vrcp.pop %v423
    %v428 = vrcp.pop %v424
    %v429 = vrcp.pop %v425
    %v430 = vmul.f32 %v406, %v426
    %v431 = vmul.f32 %v407, %v427
    %v432 = vmul.f32 %v408, %v428
    %v433 = vmul.f32 %v409, %v429
    %v434 = vpack.c.bf16 %v431, %v430
    %v435 = vpack.c.bf16 %v433, %v432
    %v436 = vpack.c.bf16 %v136, %v131
    %v437 = vpack.c.bf16 %v146, %v141
    %v438 = vld [vmem:[#allocation2 + $0x20] sm:$0x1]
    %v439 = vlaneseq
    %v440 = vshrl.u32 %v439, 7
    %v441 = vsub.s32 0, %v440
    %v442 = vrot.slane %v438, %v441
    %v444 = vsel %vm255, %v434, 0
    %v447 = vsel %vm255, %v435, 0
    %449 = vmatprep.subr.bf16.mxu0 0
    %450 = vmatpush1.bf16.msra.mxu0 %v436
    %451 = vmatprep.subr.bf16.mxu0 0
    %452 = vmatpush1.bf16.msra.mxu0 %v437
    %453 = vmatprep.subr.bf16.mxu0 0
    %454 = vmatpush1.bf16.msra.mxu0 0
    %455 = vmatprep.subr.bf16.mxu0 0
    %456 = vmatpush1.bf16.msra.mxu0 0
    %457 = vmatprep.subr.bf16.mxu0 0
    %458 = vmatpush1.bf16.msra.mxu0 0
    %459 = vmatprep.subr.bf16.mxu0 0
    %460 = vmatpush1.bf16.msra.mxu0 0
    %461 = vmatprep.subr.bf16.mxu0 0
    %462 = vmatpush1.bf16.msra.mxu0 0
    %463 = vmatprep.subr.bf16.mxu0 0
    %464 = vmatpush1.bf16.msra.mxu0 0
    %465 = vmatprep.subr.bf16.mxu0 0
    %466 = vmatpush1.bf16.msra.mxu0 0
    %467 = vmatprep.subr.bf16.mxu0 0
    %468 = vmatpush1.bf16.msra.mxu0 0
    %469 = vmatprep.subr.bf16.mxu0 0
    %470 = vmatpush1.bf16.msra.mxu0 0
    %471 = vmatprep.subr.bf16.mxu0 0
    %472 = vmatpush1.bf16.msra.mxu0 0
    %473 = vmatprep.subr.bf16.mxu0 0
    %474 = vmatpush1.bf16.msra.mxu0 0
    %475 = vmatprep.subr.bf16.mxu0 0
    %476 = vmatpush1.bf16.msra.mxu0 0
    %477 = vmatprep.subr.bf16.mxu0 0
    %478 = vmatpush1.bf16.msra.mxu0 0
    %479 = vmatprep.subr.bf16.mxu0 0
    %480 = vmatpush1.bf16.msra.mxu0 0
    %481 = vmatprep.mubr.bf16.mxu0 0
    %482 = vmatmul.mubr.bf16.gmra.mrb[0].mxu0 %v444
    %v483 = vpop.f32.mrb[0].mxu0
    %v484 = vadd.f32 %v442, %v483
    %v485 = vpop.f32.mrb[0].mxu0
    %v486 = vpop.f32.mrb[0].mxu0
    %v487 = vadd.f32 %v442, %v486
    %v488 = vpop.f32.mrb[0].mxu0
    %489 = vmatprep.mubr.bf16.mxu0 0
    %490 = vmatmul.mubr.bf16.gmra.mrb[0].mxu0 %v447
    %v491 = vpop.f32.mrb[0].mxu0
    %v492 = vadd.f32 %v442, %v491
    %v493 = vpop.f32.mrb[0].mxu0
    %v494 = vpop.f32.mrb[0].mxu0
    %v495 = vadd.f32 %v442, %v494
    %v496 = vpop.f32.mrb[0].mxu0
    %497 = vdwg.mxu0
    %498 = vst.msk [vmem:[#allocation5] sm:$0xff] %vm255, %v484
    %499 = vst.msk [vmem:[#allocation5 + $0x8] sm:$0xff] %vm255, %v487
    %500 = vst.msk [vmem:[#allocation5 + $0x10] sm:$0xff] %vm255, %v492
    %501 = vst.msk [vmem:[#allocation5 + $0x18] sm:$0xff] %vm255, %v495
    // Predicated region
    $region22: #{tpu_custom_call.1} parent=1 // pred_check
      _
    $region23: #{tpu_custom_call.1} parent=1 // pred_check_branch
      %503 = sbr.rel (0) target = $region25
    $region24: #{tpu_custom_call.1} parent=1 // pred_region
      %s505 = ssub.s32 512, 512
      %506 = vsyncadd [#allocation4], %s505
      %s507 = sshll.u32 [#allocation5], 4
      %s508 = int_to_ptr.vmem [resolvable:$true] %s507
      %513 = dma.vmem_to_hbm [thread:$0]  %s508, 512, %s4, [#allocation4], 128, 128, 8
    $region25: #{tpu_custom_call.1} parent=1 // pred_fallthru
      _
    // Predicated region
    $region26: #{tpu_custom_call.1} parent=1 // pred_check
      _
    $region27: #{tpu_custom_call.1} parent=1 // pred_check_branch
      %515 = sbr.rel (0) target = $region29
    $region28: #{tpu_custom_call.1} parent=1 // pred_region
      %516 = dma.done [#allocation4], 512
    $region29: #{tpu_custom_call.1} parent=1 // pred_fallthru
      _
    %517 = vsyncpa [#allocation3], 1
    %518 = vsyncpa [#allocation4], 1

</llo_original>
